<compile_context>
chip_gen: v7x
topology: tpu7x:2x2x1
jax: 0.10.0
libtpu: 0.0.40
codegen_flags: <defaults>
</compile_context>

<pallas_src>
import functools

import jax
import jax.numpy as jnp
from jax.experimental import pallas as pl
from jax.experimental.pallas import tpu as pltpu

LANE = 128


def _round_up(x, m):
    return (x + m - 1) // m * m


def _pick_tile(n128, target):
    """Largest multiple of 128 that divides n128 and is <= target (>=128)."""
    m = n128 // LANE
    best = 1
    for d in range(1, m + 1):
        if m % d == 0 and d * LANE <= target:
            best = d
    return best * LANE


def gcn_kernel(feat_ref, adj_ref, w_ref, bias_ref, alpha_ref, out_ref,
               acc_ref, *, tk, feat_resident):
    # feat_ref : (1, N_pad, F_in_p) bf16  (resident per batch)   or
    #            (1, TK,    F_in_p) bf16  (streamed fallback)
    # adj_ref  : (1, TM, TK)        f32   (dominant HBM stream)
    # w_ref    : (F_in_p, F_out_p)  bf16  (resident)
    # bias_ref : (1, F_out_p)       f32   (resident)
    # alpha_ref: (1,)               f32   (SMEM scalar)
    # out_ref  : (1, TM, F_out_p)   f32
    # acc_ref  : (TM, F_in_p)       f32   (scratch accumulator)
    k = pl.program_id(2)

    @pl.when(k == 0)
    def _():
        acc_ref[...] = jnp.zeros_like(acc_ref)

    if feat_resident:
        off = pl.multiple_of(k * tk, LANE)
        feat_blk = feat_ref[0, pl.ds(off, tk), :]        # bf16 (TK, F_in_p)
    else:
        feat_blk = feat_ref[0]                           # bf16 (TK, F_in_p)

    # Aggregate: acc += adj_tile @ feat_tile  (bf16 MXU, f32 accumulate).
    adj_blk = adj_ref[0].astype(jnp.bfloat16)            # (TM, TK)
    acc_ref[...] += jnp.dot(adj_blk, feat_blk,
                            preferred_element_type=jnp.float32)

    @pl.when(k == pl.num_programs(2) - 1)
    def _():
        # Epilogue: bf16 projection (cheap on every MXU generation), then
        # bias + PReLU in f32.
        h = jnp.dot(acc_ref[...].astype(jnp.bfloat16), w_ref[...],
                    preferred_element_type=jnp.float32)
        h = h + bias_ref[...]
        alpha = alpha_ref[0]
        out_ref[0] = jnp.where(h >= 0, h, alpha * h).astype(out_ref.dtype)


@functools.partial(jax.jit, static_argnames=("tm", "tk"))
def gcn_layer(feat, adj, weight, bias, alpha, *, tm=None, tk=None):
    """feat: (B, N, F_in), adj: (B, N, N), weight: (F_out, F_in) torch layout,
    bias: (F_out,), alpha: scalar PReLU parameter.  Returns (B, N, F_out) f32."""
    B, N, f_in = feat.shape
    f_out = weight.shape[0]

    f_in_p = _round_up(f_in, LANE)       # lane-dense feature dims
    f_out_p = _round_up(f_out, LANE)
    n_pad = _round_up(N, LANE)           # tiles divide n_pad -> waste < 128 rows

    if tm is None:
        tm = _pick_tile(n_pad, 256)      # row tile (output / accumulator)
    if tk is None:
        tk = _pick_tile(n_pad, 2048)     # reduction tile (adj columns)

    # ---- generation-aware VMEM budget -------------------------------------
    try:
        vmem_cap = pltpu.get_tpu_info().vmem_capacity_bytes
    except Exception:
        vmem_cap = 64 * 1024 * 1024      # assume smallest (v7x) if query fails

    # Keep feat resident per batch when its double-buffered block is small
    # relative to VMEM; otherwise stream it per reduction tile.
    feat_resident = (2 * n_pad * f_in_p * 2) <= vmem_cap // 4

    # ---- operand prep (avoid extra HBM passes when already aligned) -------
    adj_p = adj.astype(jnp.float32)
    if n_pad != N:
        adj_p = jnp.pad(adj_p, ((0, 0), (0, n_pad - N), (0, n_pad - N)))

    feat_p = feat.astype(jnp.float32)
    if n_pad != N or f_in_p != f_in:
        feat_p = jnp.pad(feat_p, ((0, 0), (0, n_pad - N), (0, f_in_p - f_in)))
    feat_p = feat_p.astype(jnp.bfloat16)          # small tensor: one-off cast

    # TODO(synk): for very large f_in/f_out, split W along f_out with an extra
    # grid axis instead of keeping it fully resident.
    w_p = weight.T.astype(jnp.float32)
    if f_in_p != f_in or f_out_p != f_out:
        w_p = jnp.pad(w_p, ((0, f_in_p - f_in), (0, f_out_p - f_out)))
    w_p = w_p.astype(jnp.bfloat16)

    bias_p = jnp.pad(bias.astype(jnp.float32),
                     (0, f_out_p - f_out)).reshape(1, f_out_p)
    alpha_s = jnp.asarray(alpha, jnp.float32).reshape(1)

    grid = (B, n_pad // tm, n_pad // tk)

    if feat_resident:
        feat_spec = pl.BlockSpec((1, n_pad, f_in_p), lambda b, i, k: (b, 0, 0))
        feat_bytes = B * n_pad * f_in_p * 2
        feat_vmem = 2 * n_pad * f_in_p * 2
    else:
        feat_spec = pl.BlockSpec((1, tk, f_in_p), lambda b, i, k: (b, k, 0))
        feat_bytes = B * (n_pad // tm) * n_pad * f_in_p * 2
        feat_vmem = 2 * tk * f_in_p * 2

    # ---- advisory cost estimate -------------------------------------------
    flops = 2 * B * n_pad * n_pad * f_in_p + 2 * B * n_pad * f_in_p * f_out_p
    bytes_accessed = (B * n_pad * n_pad * 4        # adj (f32, read once)
                      + feat_bytes                 # feat (bf16)
                      + f_in_p * f_out_p * 2       # W (bf16)
                      + B * n_pad * f_out_p * 4)   # output (f32)
    cost = pl.CostEstimate(flops=flops, transcendentals=0,
                           bytes_accessed=bytes_accessed)

    # ---- scoped-VMEM limit: unconditional, with margin, below capacity -----
    vmem_need = (feat_vmem
                 + 2 * tm * tk * 4                 # adj tiles (double-buffered)
                 + 2 * f_in_p * f_out_p * 2        # W (counted double, safety)
                 + 2 * f_out_p * 4                 # bias
                 + 2 * tm * f_out_p * 4            # output tiles
                 + tm * f_in_p * 4)                # accumulator scratch
    vmem_limit = int(min(max(2 * vmem_need, 32 * 1024 * 1024),
                         0.75 * vmem_cap))

    out_p = pl.pallas_call(
        functools.partial(gcn_kernel, tk=tk, feat_resident=feat_resident),
        out_shape=jax.ShapeDtypeStruct((B, n_pad, f_out_p), jnp.float32),
        grid_spec=pltpu.PrefetchScalarGridSpec(
            num_scalar_prefetch=0,
            grid=grid,
            in_specs=[
                feat_spec,
                pl.BlockSpec((1, tm, tk), lambda b, i, k: (b, i, k)),
                pl.BlockSpec((f_in_p, f_out_p), lambda b, i, k: (0, 0)),
                pl.BlockSpec((1, f_out_p), lambda b, i, k: (0, 0)),
                pl.BlockSpec(memory_space=pltpu.MemorySpace.SMEM),
            ],
            out_specs=pl.BlockSpec((1, tm, f_out_p), lambda b, i, k: (b, i, 0)),
            scratch_shapes=[pltpu.VMEM((tm, f_in_p), jnp.float32)],
        ),
        compiler_params=pltpu.CompilerParams(
            dimension_semantics=("parallel", "parallel", "arbitrary"),
            vmem_limit_bytes=vmem_limit),
        cost_estimate=cost,
    )(feat_p, adj_p, w_p, bias_p, alpha_s)

    if n_pad == N and f_out_p == f_out:
        return out_p                     # already exact shape: no slice copy
    return out_p[:, :N, :f_out]


def _xavier_uniform(key, shape):
    # torch.nn.init.xavier_uniform_ on an (out, in) Linear weight
    fan_out, fan_in = shape
    bound = (6.0 / (fan_in + fan_out)) ** 0.5
    return jax.random.uniform(key, shape, jnp.float32, -bound, bound)


if __name__ == "__main__":
    key = jax.random.PRNGKey(0)
    k_feat, k_adj, k_w = jax.random.split(key, 3)

    B, N, F_IN, F_OUT = 2, 16, 8, 32

    feat = jax.random.normal(k_feat, (B, N, F_IN), jnp.float32)
    adj = jax.random.uniform(k_adj, (B, N, N), jnp.float32)

    weight = _xavier_uniform(k_w, (F_OUT, F_IN))     # nn.Linear weight (out, in)
    bias = jnp.zeros((F_OUT,), jnp.float32)          # bias.data.fill_(0.0)
    alpha = jnp.float32(0.25)                        # nn.PReLU() default init

    out = gcn_layer(feat, adj, weight, bias, alpha)
    out = jax.block_until_ready(out)

    # Reference 1: mirror the kernel's numerics exactly (bf16-rounded adj/feat,
    # f32-accumulated aggregation, bf16-rounded acc & W for the projection).
    adj_q = adj.astype(jnp.bfloat16).astype(jnp.float32)
    feat_q = feat.astype(jnp.bfloat16).astype(jnp.float32)
    agg_q = jnp.einsum("bnm,bmf->bnf", adj_q, feat_q)
    agg_b = agg_q.astype(jnp.bfloat16).astype(jnp.float32)
    w_b = weight.T.astype(jnp.bfloat16).astype(jnp.float32)
    h_q = jnp.einsum("bnf,fo->bno", agg_b, w_b) + bias
    ref_q = jnp.where(h_q >= 0, h_q, alpha * h_q)
    assert jnp.allclose(out, ref_q, atol=2e-3, rtol=2e-3), "mismatch vs bf16 ref"

    # Reference 2: exact PyTorch-order f32 semantics -- looser tolerance
    # (bf16 streams + bf16 epilogue + reassociation change rounding slightly).
    h32 = jnp.einsum("bnf,of->bno", feat, weight)
    agg32 = jnp.einsum("bnm,bmo->bno", adj, h32) + bias
    ref32 = jnp.where(agg32 >= 0, agg32, alpha * agg32)
    assert jnp.allclose(out, ref32, atol=8e-2, rtol=5e-2), "mismatch vs f32 ref"

    print("KERNEL_OK")
</pallas_src>

<mosaic_0001>
module attributes {stable_mosaic.version = 11 : i64} {
  func.func @gcn_kernel(%arg0: i32, %arg1: i32, %arg2: i32, %arg3: memref<1x128x128xbf16, #tpu.memory_space<vmem>>, %arg4: memref<1x128x128xf32, #tpu.memory_space<vmem>>, %arg5: memref<128x128xbf16, #tpu.memory_space<vmem>>, %arg6: memref<1x128xf32, #tpu.memory_space<vmem>>, %arg7: memref<1xf32, #tpu.memory_space<smem>>, %arg8: memref<1x128x128xf32, #tpu.memory_space<vmem>>, %arg9: memref<128x128xf32, #tpu.memory_space<vmem>>) attributes {dimension_semantics = [#tpu.dimension_semantics<parallel>, #tpu.dimension_semantics<parallel>, #tpu.dimension_semantics<arbitrary>], iteration_bounds = array<i64: 2, 1, 1>, scalar_prefetch = 0 : i64, scratch_operands = 1 : i64, tpu.core_type = #tpu.core_type<tc>, window_params = [{transform_indices = @transform_0, window_bounds = array<i64: 1, 128, 128>}, {transform_indices = @transform_1, window_bounds = array<i64: 1, 128, 128>}, {pipeline_mode = #tpu.pipeline_mode<synchronous>, transform_indices = @transform_2, window_bounds = array<i64: 128, 128>}, {pipeline_mode = #tpu.pipeline_mode<synchronous>, transform_indices = @transform_3, window_bounds = array<i64: 1, 128>}, {transform_indices = @transform_4, window_bounds = array<i64: 1>}, {transform_indices = @transform_5, window_bounds = array<i64: 1, 128, 128>}]} {
    %c0_i32 = arith.constant 0 : i32
    %0 = arith.cmpi eq, %arg2, %c0_i32 : i32
    %1 = arith.extui %0 : i1 to i32
    %c0_i32_0 = arith.constant 0 : i32
    %2 = arith.cmpi ne, %1, %c0_i32_0 : i32
    scf.if %2 {
      %cst_11 = arith.constant 0.000000e+00 : f32
      %18 = vector.broadcast %cst_11 : f32 to vector<128x128xf32>
      %c0_12 = arith.constant 0 : index
      %c0_13 = arith.constant 0 : index
      %19 = vector.load %arg9[%c0_12, %c0_13] : memref<128x128xf32, #tpu.memory_space<vmem>>, vector<128x128xf32>
      tpu.vector_store %arg9[%c0_12, %c0_13], %18 {strides = array<i32>} : memref<128x128xf32, #tpu.memory_space<vmem>>, vector<128x128xf32>,
    } else {
    }
    %c128_i32 = arith.constant 128 : i32
    %3 = arith.muli %arg2, %c128_i32 : i32
    %4 = tpu.assume_multiple %3, 128 : i32
    %c0 = arith.constant 0 : index
    %5 = arith.index_cast %4 : i32 to index
    %c0_1 = arith.constant 0 : index
    %6 = vector.load %arg3[%c0, %5, %c0_1] : memref<1x128x128xbf16, #tpu.memory_space<vmem>>, vector<1x128x128xbf16>
    %7 = vector.shape_cast %6 : vector<1x128x128xbf16> to vector<128x128xbf16>
    %c0_2 = arith.constant 0 : index
    %c0_3 = arith.constant 0 : index
    %c0_4 = arith.constant 0 : index
    %8 = vector.load %arg4[%c0_2, %c0_3, %c0_4] : memref<1x128x128xf32, #tpu.memory_space<vmem>>, vector<1x128x128xf32>
    %9 = vector.shape_cast %8 : vector<1x128x128xf32> to vector<128x128xf32>
    %10 = arith.truncf %9 : vector<128x128xf32> to vector<128x128xbf16>
    %c0_5 = arith.constant 0 : index
    %c0_6 = arith.constant 0 : index
    %11 = vector.load %arg9[%c0_5, %c0_6] : memref<128x128xf32, #tpu.memory_space<vmem>>, vector<128x128xf32>
    %cst = arith.constant dense<0.000000e+00> : vector<128x128xf32>
    %12 = tpu.matmul %10, %7, %cst {dimension_numbers = #tpu.dot_dimension_numbers<[1], [0], [0], [1], [0, 0, 1, 1], [], []>} : vector<128x128xbf16>, vector<128x128xbf16>, vector<128x128xf32> -> vector<128x128xf32>
    %13 = arith.addf %11, %12 : vector<128x128xf32>
    %c0_7 = arith.constant 0 : index
    %c0_8 = arith.constant 0 : index
    %14 = vector.load %arg9[%c0_7, %c0_8] : memref<128x128xf32, #tpu.memory_space<vmem>>, vector<128x128xf32>
    tpu.vector_store %arg9[%c0_7, %c0_8], %13 {strides = array<i32>} : memref<128x128xf32, #tpu.memory_space<vmem>>, vector<128x128xf32>,
    %c0_i32_9 = arith.constant 0 : i32
    %15 = arith.cmpi eq, %arg2, %c0_i32_9 : i32
    %16 = arith.extui %15 : i1 to i32
    %c0_i32_10 = arith.constant 0 : i32
    %17 = arith.cmpi ne, %16, %c0_i32_10 : i32
    scf.if %17 {
      %c0_11 = arith.constant 0 : index
      %c0_12 = arith.constant 0 : index
      %18 = vector.load %arg9[%c0_11, %c0_12] : memref<128x128xf32, #tpu.memory_space<vmem>>, vector<128x128xf32>
      %19 = arith.truncf %18 : vector<128x128xf32> to vector<128x128xbf16>
      %c0_13 = arith.constant 0 : index
      %c0_14 = arith.constant 0 : index
      %20 = vector.load %arg5[%c0_13, %c0_14] : memref<128x128xbf16, #tpu.memory_space<vmem>>, vector<128x128xbf16>
      %cst_15 = arith.constant dense<0.000000e+00> : vector<128x128xf32>
      %21 = tpu.matmul %19, %20, %cst_15 {dimension_numbers = #tpu.dot_dimension_numbers<[1], [0], [0], [1], [0, 0, 1, 1], [], []>} : vector<128x128xbf16>, vector<128x128xbf16>, vector<128x128xf32> -> vector<128x128xf32>
      %c0_16 = arith.constant 0 : index
      %c0_17 = arith.constant 0 : index
      %22 = vector.load %arg6[%c0_16, %c0_17] : memref<1x128xf32, #tpu.memory_space<vmem>>, vector<1x128xf32>
      %23 = vector.broadcast %22 : vector<1x128xf32> to vector<128x128xf32>
      %24 = arith.addf %21, %23 : vector<128x128xf32>
      %c0_18 = arith.constant 0 : index
      %25 = memref.load %arg7[%c0_18] : memref<1xf32, #tpu.memory_space<smem>>
      %cst_19 = arith.constant 0.000000e+00 : f32
      %26 = vector.broadcast %cst_19 : f32 to vector<128x128xf32>
      %27 = arith.cmpf oge, %24, %26 : vector<128x128xf32>
      %28 = vector.broadcast %25 : f32 to vector<128x128xf32>
      %29 = arith.mulf %28, %24 : vector<128x128xf32>
      %30 = arith.select %27, %24, %29 : vector<128x128xi1>, vector<128x128xf32>
      %c0_20 = arith.constant 0 : index
      %c0_21 = arith.constant 0 : index
      %c0_22 = arith.constant 0 : index
      %31 = vector.load %arg8[%c0_20, %c0_21, %c0_22] : memref<1x128x128xf32, #tpu.memory_space<vmem>>, vector<1x128x128xf32>
      %32 = vector.shape_cast %31 : vector<1x128x128xf32> to vector<128x128xf32>
      %33 = vector.shape_cast %30 : vector<128x128xf32> to vector<1x128x128xf32>
      tpu.vector_store %arg8[%c0_20, %c0_21, %c0_22], %33 {strides = array<i32>} : memref<1x128x128xf32, #tpu.memory_space<vmem>>, vector<1x128x128xf32>,
    } else {
    }
    return
  }
  func.func @transform_0(%arg0: i32, %arg1: i32, %arg2: i32) -> (i32, i32, i32) {
    %c0_i32 = arith.constant 0 : i32
    %c0_i32_0 = arith.constant 0 : i32
    %c0_i32_1 = arith.constant 0 : i32
    return %arg0, %c0_i32, %c0_i32_0 : i32, i32, i32
  }
  func.func @transform_1(%arg0: i32, %arg1: i32, %arg2: i32) -> (i32, i32, i32) {
    %c0_i32 = arith.constant 0 : i32
    return %arg0, %arg1, %arg2 : i32, i32, i32
  }
  func.func @transform_2(%arg0: i32, %arg1: i32, %arg2: i32) -> (i32, i32) {
    %c0_i32 = arith.constant 0 : i32
    %c0_i32_0 = arith.constant 0 : i32
    %c0_i32_1 = arith.constant 0 : i32
    return %c0_i32, %c0_i32_0 : i32, i32
  }
  func.func @transform_3(%arg0: i32, %arg1: i32, %arg2: i32) -> (i32, i32) {
    %c0_i32 = arith.constant 0 : i32
    %c0_i32_0 = arith.constant 0 : i32
    %c0_i32_1 = arith.constant 0 : i32
    return %c0_i32, %c0_i32_0 : i32, i32
  }
  func.func @transform_4(%arg0: i32, %arg1: i32, %arg2: i32) -> i32 {
    %c0_i32 = arith.constant 0 : i32
    %c0_i32_0 = arith.constant 0 : i32
    return %c0_i32 : i32
  }
  func.func @transform_5(%arg0: i32, %arg1: i32, %arg2: i32) -> (i32, i32, i32) {
    %c0_i32 = arith.constant 0 : i32
    %c0_i32_0 = arith.constant 0 : i32
    return %arg0, %arg1, %c0_i32 : i32, i32, i32
  }
}

</mosaic_0001>

<llo_original>
// kernel: gcn_layer.1
$region0: #{gcn_layer.1}
  #allocation0 [shape = 'u32[]', space=smem, size = 0x4, offset = 0x4, fixed_abs, tag = 'smem constant byte address 0x4 - core index']
  #allocation1 [shape = 'u32[144,128]{1,0:T(1,128)}', space=vmem, size = 0x12000, scoped, tag = 'internal scratch']
  #allocation2 [shape = 'f32[128,128]{1,0:T(8,128)}', space=vmem, size = 0x10000, scoped, tag = 'scratch operand']
  #allocation3 [shape = 'f32[1]{0:T(128)S(6)}', space=smem, size = 0x200, scoped, tag = 'scoped memory for gcn_layer.1']
  %s0 = inlined_call_operand.vmem [shape: bf16[2,128,128], index: 0, kind: input, shape index: {}]
  %s1 = inlined_call_operand.vmem [shape: f32[2,128,128], index: 1, kind: input, shape index: {}]
  %s2 = inlined_call_operand.vmem [shape: bf16[128,128], index: 2, kind: input, shape index: {}]
  %s3 = inlined_call_operand.vmem [shape: f32[1,128], index: 3, kind: input, shape index: {}]
  %s4 = inlined_call_operand.<no memory space> [shape: f32[1], index: 4, kind: input, shape index: {}]
  %s5 = inlined_call_operand.vmem [shape: f32[2,128,128], index: 5, kind: output, shape index: {}]
  %s6 = sld [smem:[#allocation0]]
  $region61: #{gcn_layer.1} parent=0
    _
  %s8 = ssub.s32 1, %s6
  %s9 = scalar_select 0, %s8, %s6
  %10 = sst [smem:[#allocation3]] %s4
  loop: start=0, step=1, limit=4
  $region2: #{gcn_layer.1} parent=0 // loop_pre_header
    _
  $region3: #{gcn_layer.1} parent=0 // loop_header
    %s12 = sphi 0, %s16
    %p13 = scmp.ge.s32.totalorder %s12, 4
    %s19 = sphi 0, %s38
    %s20 = sphi 0, %s34
    %s21 = sphi 0, %s30
    %s22 = sphi 0, %s19
    %s23 = sphi 0, %s20
    %s24 = sphi 0, %s21
    %s25 = sphi 0, %s22
    %s26 = sphi 0, %s23
    %s27 = sphi 0, %s24
    %s41 = sphi 0, %s43
    %s44 = sphi 0, %s41
    %s45 = sphi 0, %s44
    %s61 = sphi 0, %s45
    %s71 = sphi 0, %s73
    %s74 = sphi 0, %s71
    %s75 = sphi 0, %s74
    %s91 = sphi 0, %s75
    %s95 = sphi 0, %s95
    %s97 = sphi 0, %s95
    %s98 = sphi 0, %s97
    %s112 = sphi 0, %s98
    %s116 = sphi 0, %s116
    %s118 = sphi 0, %s116
    %s119 = sphi 0, %s118
    %s133 = sphi 0, %s119
    %s137 = sphi 0, %s137
    %s139 = sphi 0, %s137
    %s140 = sphi 0, %s139
    %s154 = sphi 0, %s140
    %s162 = sphi 0, %s164
    %s165 = sphi 0, %s162
    %s166 = sphi 0, %s165
    %s182 = sphi 0, %s166
  $region4: #{gcn_layer.1} parent=0 // loop_header_branch
    %15 = sbr.rel (%p13) target = $region8
  $region5: #{gcn_layer.1} parent=0 // loop_body
    %s17 = ssub.s32 %s12, 1
    %s18 = ssub.s32 %s12, 2
    %s28 = sadd.s32 1, %s21
    %p29 = scmp.ge.s32.totalorder %s28, 1
    %s30 = scalar_select %p29, 0, %s28
    %s31 = sadd.s32 1, %s20
    %s32 = scalar_select %p29, %s31, %s20
    %p33 = scmp.ge.s32.totalorder %s32, 1
    %s34 = scalar_select %p33, 0, %s32
    %s35 = sadd.s32 1, %s19
    %s36 = scalar_select %p33, %s35, %s19
    %p37 = scmp.ge.s32.totalorder %s36, 2
    %s38 = scalar_select %p37, 0, %s36
    %s39 = ssub.s32 %s19, %s38
    %p40 = scmp.eq.s32.totalorder %s39, 0
    %s42 = sadd.s32 %s41, 1
    %s43 = scalar_select %p40, %s41, %s42
    %p46 = pneg %p40
    %p47 = scmp.eq.s32.totalorder %s12, 1
    %p48 = por %p46, %p47
    %p49 = scmp.ne.s32.totalorder %s41, %s44
    %p50 = scmp.eq.s32.totalorder %s12, 0
    %p51 = por %p49, %p50
    %p52 = scmp.ne.s32.totalorder %s41, %s44
    %p53 = scmp.eq.s32.totalorder %s17, 1
    %p54 = por %p52, %p53
    %p55 = scmp.ne.s32.totalorder %s44, %s45
    %p56 = scmp.eq.s32.totalorder %s17, 0
    %p57 = por %p55, %p56
    %p58 = scmp.ne.s32.totalorder %s44, %s45
    %p59 = scmp.eq.s32.totalorder %s18, 1
    %p60 = por %p58, %p59
    %p62 = scmp.ne.s32.totalorder %s45, %s61
    %p63 = scmp.eq.s32.totalorder %s18, 0
    %p64 = por %p62, %p63
    %s65 = ssub.s32 %s19, %s38
    %s66 = ssub.s32 %s20, %s34
    %s67 = sor.u32 %s65, %s66
    %s68 = ssub.s32 %s21, %s30
    %s69 = sor.u32 %s67, %s68
    %p70 = scmp.eq.s32.totalorder %s69, 0
    %s72 = sadd.s32 %s71, 1
    %s73 = scalar_select %p70, %s71, %s72
    %p76 = pneg %p70
    %p77 = scmp.eq.s32.totalorder %s12, 1
    %p78 = por %p76, %p77
    %p79 = scmp.ne.s32.totalorder %s71, %s74
    %p80 = scmp.eq.s32.totalorder %s12, 0
    %p81 = por %p79, %p80
    %p82 = scmp.ne.s32.totalorder %s71, %s74
    %p83 = scmp.eq.s32.totalorder %s17, 1
    %p84 = por %p82, %p83
    %p85 = scmp.ne.s32.totalorder %s74, %s75
    %p86 = scmp.eq.s32.totalorder %s17, 0
    %p87 = por %p85, %p86
    %p88 = scmp.ne.s32.totalorder %s74, %s75
    %p89 = scmp.eq.s32.totalorder %s18, 1
    %p90 = por %p88, %p89
    %p92 = scmp.ne.s32.totalorder %s75, %s91
    %p93 = scmp.eq.s32.totalorder %s18, 0
    %p94 = por %p92, %p93
    %s96 = sadd.s32 %s95, 1
    %p99 = scmp.eq.s32.totalorder %s12, 1
    %p100 = scmp.ne.s32.totalorder %s95, %s97
    %p101 = scmp.eq.s32.totalorder %s12, 0
    %p102 = por %p100, %p101
    %p103 = scmp.ne.s32.totalorder %s95, %s97
    %p104 = scmp.eq.s32.totalorder %s17, 1
    %p105 = por %p103, %p104
    %p106 = scmp.ne.s32.totalorder %s97, %s98
    %p107 = scmp.eq.s32.totalorder %s17, 0
    %p108 = por %p106, %p107
    %p109 = scmp.ne.s32.totalorder %s97, %s98
    %p110 = scmp.eq.s32.totalorder %s18, 1
    %p111 = por %p109, %p110
    %p113 = scmp.ne.s32.totalorder %s98, %s112
    %p114 = scmp.eq.s32.totalorder %s18, 0
    %p115 = por %p113, %p114
    %s117 = sadd.s32 %s116, 1
    %p120 = scmp.eq.s32.totalorder %s12, 1
    %p121 = scmp.ne.s32.totalorder %s116, %s118
    %p122 = scmp.eq.s32.totalorder %s12, 0
    %p123 = por %p121, %p122
    %p124 = scmp.ne.s32.totalorder %s116, %s118
    %p125 = scmp.eq.s32.totalorder %s17, 1
    %p126 = por %p124, %p125
    %p127 = scmp.ne.s32.totalorder %s118, %s119
    %p128 = scmp.eq.s32.totalorder %s17, 0
    %p129 = por %p127, %p128
    %p130 = scmp.ne.s32.totalorder %s118, %s119
    %p131 = scmp.eq.s32.totalorder %s18, 1
    %p132 = por %p130, %p131
    %p134 = scmp.ne.s32.totalorder %s119, %s133
    %p135 = scmp.eq.s32.totalorder %s18, 0
    %p136 = por %p134, %p135
    %s138 = sadd.s32 %s137, 1
    %p141 = scmp.eq.s32.totalorder %s12, 1
    %p142 = scmp.ne.s32.totalorder %s137, %s139
    %p143 = scmp.eq.s32.totalorder %s12, 0
    %p144 = por %p142, %p143
    %p145 = scmp.ne.s32.totalorder %s137, %s139
    %p146 = scmp.eq.s32.totalorder %s17, 1
    %p147 = por %p145, %p146
    %p148 = scmp.ne.s32.totalorder %s139, %s140
    %p149 = scmp.eq.s32.totalorder %s17, 0
    %p150 = por %p148, %p149
    %p151 = scmp.ne.s32.totalorder %s139, %s140
    %p152 = scmp.eq.s32.totalorder %s18, 1
    %p153 = por %p151, %p152
    %p155 = scmp.ne.s32.totalorder %s140, %s154
    %p156 = scmp.eq.s32.totalorder %s18, 0
    %p157 = por %p155, %p156
    %s158 = ssub.s32 %s19, %s38
    %s159 = ssub.s32 %s20, %s34
    %s160 = sor.u32 %s158, %s159
    %p161 = scmp.eq.s32.totalorder %s160, 0
    %s163 = sadd.s32 %s162, 1
    %s164 = scalar_select %p161, %s162, %s163
    %p167 = pneg %p161
    %p168 = scmp.eq.s32.totalorder %s12, 1
    %p169 = por %p167, %p168
    %p170 = scmp.ne.s32.totalorder %s162, %s165
    %p171 = scmp.eq.s32.totalorder %s12, 0
    %p172 = por %p170, %p171
    %p173 = scmp.ne.s32.totalorder %s162, %s165
    %p174 = scmp.eq.s32.totalorder %s17, 1
    %p175 = por %p173, %p174
    %p176 = scmp.ne.s32.totalorder %s165, %s166
    %p177 = scmp.eq.s32.totalorder %s17, 0
    %p178 = por %p176, %p177
    %p179 = scmp.ne.s32.totalorder %s165, %s166
    %p180 = scmp.eq.s32.totalorder %s18, 1
    %p181 = por %p179, %p180
    %p183 = scmp.ne.s32.totalorder %s166, %s182
    %p184 = scmp.eq.s32.totalorder %s18, 0
    %p185 = por %p183, %p184
    %p186 = scmp.le.s32.totalorder 1, %s12
    %p187 = scmp.lt.s32.totalorder %s12, 3
    %p188 = pnand %p186, %p187
    %p189 = pneg %p188
    // Predicated region
    $region9: #{gcn_layer.1} parent=5 // pred_check
      _
    $region10: #{gcn_layer.1} parent=5 // pred_check_branch
      %191 = sbr.rel (%p188) target = $region12
    $region11: #{gcn_layer.1} parent=5 // pred_region
      %s192 = ssub.s32 %s12, 1
      // Predicated region
      $region13: #{gcn_layer.1} parent=11 // pred_check
        %p193 = pneg %p108
      $region14: #{gcn_layer.1} parent=11 // pred_check_branch
        %195 = sbr.rel (%p193) target = $region16
      $region15: #{gcn_layer.1} parent=11 // pred_region
        _
      $region16: #{gcn_layer.1} parent=11 // pred_fallthru
        _
      // Predicated region
      $region17: #{gcn_layer.1} parent=11 // pred_check
        %p196 = pneg %p129
      $region18: #{gcn_layer.1} parent=11 // pred_check_branch
        %198 = sbr.rel (%p196) target = $region20
      $region19: #{gcn_layer.1} parent=11 // pred_region
        _
      $region20: #{gcn_layer.1} parent=11 // pred_fallthru
        _
      // Predicated region
      $region21: #{gcn_layer.1} parent=11 // pred_check
        %p199 = pneg %p150
      $region22: #{gcn_layer.1} parent=11 // pred_check_branch
        %201 = sbr.rel (%p199) target = $region24
      $region23: #{gcn_layer.1} parent=11 // pred_region
        _
      $region24: #{gcn_layer.1} parent=11 // pred_fallthru
        _
    $region12: #{gcn_layer.1} parent=5 // pred_fallthru
      _
    %p202 = scmp.lt.s32.totalorder %s12, 2
    // Predicated region
    $region25: #{gcn_layer.1} parent=5 // pred_check
      %p203 = pneg %p202
    $region26: #{gcn_layer.1} parent=5 // pred_check_branch
      %205 = sbr.rel (%p203) target = $region28
    $region27: #{gcn_layer.1} parent=5 // pred_region
      // Predicated region
      $region29: #{gcn_layer.1} parent=27 // pred_check
        %p206 = pneg %p51
      $region30: #{gcn_layer.1} parent=27 // pred_check_branch
        %208 = sbr.rel (%p206) target = $region32
      $region31: #{gcn_layer.1} parent=27 // pred_region
        %p209 = scmp.lt.s32.totalorder %s19, 1
        %s210 = scalar_select %p209, %s19, 1
        %s211 = smul.addr %s210, 16
        %s212 = smul.addr %s211, 4
        %s213 = scalar_lea.vmem %s0, %s212
      $region32: #{gcn_layer.1} parent=27 // pred_fallthru
        _
      // Predicated region
      $region33: #{gcn_layer.1} parent=27 // pred_check
        %p214 = pneg %p81
      $region34: #{gcn_layer.1} parent=27 // pred_check_branch
        %216 = sbr.rel (%p214) target = $region36
      $region35: #{gcn_layer.1} parent=27 // pred_region
        %s217 = smul.u32 16, %s20
        %p218 = scmp.lt.s32.totalorder %s19, 1
        %s219 = scalar_select %p218, %s19, 1
        %p220 = scmp.lt.s32.totalorder %s217, 15
        %s221 = scalar_select %p220, %s217, 15
        %p222 = scmp.lt.s32.totalorder %s21, 0
        %s223 = scalar_select %p222, %s21, 0
        %s224 = sadd.s32 %s223, %s221
        %s225 = smul.addr %s219, 16
        %s226 = sadd.s32 %s224, %s225
        %s227 = smul.addr %s226, 8
        %s228 = scalar_lea.vmem %s1, %s227
        %s229 = smul.u32 16, %s20
      $region36: #{gcn_layer.1} parent=27 // pred_fallthru
        _
    $region28: #{gcn_layer.1} parent=5 // pred_fallthru
      _
    %p230 = scmp.le.s32.totalorder 1, %s12
    %p231 = scmp.lt.s32.totalorder %s12, 3
    %p232 = pnand %p230, %p231
    %p233 = pneg %p232
    // Predicated region
    $region37: #{gcn_layer.1} parent=5 // pred_check
      _
    $region38: #{gcn_layer.1} parent=5 // pred_check_branch
      %235 = sbr.rel (%p232) target = $region40
    $region39: #{gcn_layer.1} parent=5 // pred_region
      %s236 = ssub.s32 %s12, 1
      %p237 = scmp.lt.s32.totalorder %s22, 1
      %s238 = scalar_select %p237, %s22, 1
      %s239 = smul.addr %s238, 16
      %s240 = smul.addr %s239, 4
      %s241 = scalar_lea.vmem %s0, %s240
      %p242 = pneg %p57
      %p243 = pneg %p54
      %s244 = smul.u32 16, %s23
      %p245 = scmp.lt.s32.totalorder %s22, 1
      %s246 = scalar_select %p245, %s22, 1
      %p247 = scmp.lt.s32.totalorder %s244, 15
      %s248 = scalar_select %p247, %s244, 15
      %p249 = scmp.lt.s32.totalorder %s24, 0
      %s250 = scalar_select %p249, %s24, 0
      %s251 = sadd.s32 %s250, %s248
      %s252 = smul.addr %s246, 16
      %s253 = sadd.s32 %s251, %s252
      %s254 = smul.addr %s253, 8
      %s255 = scalar_lea.vmem %s1, %s254
      %p256 = pneg %p87
      %p257 = pneg %p84
      %p258 = pneg %p108
      %p259 = pneg %p105
      %p260 = pneg %p129
      %p261 = pneg %p126
      %p262 = pneg %p150
      %p263 = pneg %p147
      %p264 = pneg %p178
      %p265 = pneg %p175
      %s266 = smul.u32 16, %s23
      %p267 = scmp.lt.s32.totalorder %s22, 1
      %s268 = scalar_select %p267, %s22, 1
      %p269 = scmp.lt.s32.totalorder %s266, 15
      %s270 = scalar_select %p269, %s266, 15
      %s271 = smul.addr %s268, 16
      %s272 = sadd.s32 %s270, %s271
      %s273 = smul.addr %s272, 8
      %s274 = scalar_lea.vmem %s5, %s273
      %p275 = scmp.lt.s32.totalorder %s22, 1
      %s276 = scalar_select %p275, %s22, 1
      %s277 = smul.addr %s276, 16
      %s278 = smul.addr %s277, 4
      %s279 = scalar_lea.vmem %s0, %s278
      %s280 = smul.u32 16, %s23
      %p281 = scmp.lt.s32.totalorder %s22, 1
      %s282 = scalar_select %p281, %s22, 1
      %p283 = scmp.lt.s32.totalorder %s280, 15
      %s284 = scalar_select %p283, %s280, 15
      %p285 = scmp.lt.s32.totalorder %s24, 0
      %s286 = scalar_select %p285, %s24, 0
      %s287 = sadd.s32 %s286, %s284
      %s288 = smul.addr %s282, 16
      %s289 = sadd.s32 %s287, %s288
      %s290 = smul.addr %s289, 8
      %s291 = scalar_lea.vmem %s1, %s290
      %s292 = smul.u32 16, %s23
      %s293 = smul.u32 16, %s23
      %p294 = scmp.lt.s32.totalorder %s22, 1
      %s295 = scalar_select %p294, %s22, 1
      %p296 = scmp.lt.s32.totalorder %s293, 15
      %s297 = scalar_select %p296, %s293, 15
      %s298 = smul.addr %s295, 16
      %s299 = sadd.s32 %s297, %s298
      %s300 = smul.addr %s299, 8
      %s301 = scalar_lea.vmem %s5, %s300
      %s302 = smul.u32 16, %s23
      %p304 = scmp.eq.s32.totalorder %s24, 0
      // Predicated region
      $region41: #{gcn_layer.1} parent=39 // pred_check
        %p305 = pneg %p304
      $region42: #{gcn_layer.1} parent=39 // pred_check_branch
        %307 = sbr.rel (%p305) target = $region44
      $region43: #{gcn_layer.1} parent=39 // pred_region
        %308 = vst [vmem:[#allocation2] sm:$0xff] 0.0
        %309 = vst [vmem:[#allocation2 + $0x8] sm:$0xff] 0.0
        %310 = vst [vmem:[#allocation2 + $0x10] sm:$0xff] 0.0
        %311 = vst [vmem:[#allocation2 + $0x18] sm:$0xff] 0.0
        %312 = vst [vmem:[#allocation2 + $0x20] sm:$0xff] 0.0
        %313 = vst [vmem:[#allocation2 + $0x28] sm:$0xff] 0.0
        %314 = vst [vmem:[#allocation2 + $0x30] sm:$0xff] 0.0
        %315 = vst [vmem:[#allocation2 + $0x38] sm:$0xff] 0.0
        %316 = vst [vmem:[#allocation2 + $0x40] sm:$0xff] 0.0
        %317 = vst [vmem:[#allocation2 + $0x48] sm:$0xff] 0.0
        %318 = vst [vmem:[#allocation2 + $0x50] sm:$0xff] 0.0
        %319 = vst [vmem:[#allocation2 + $0x58] sm:$0xff] 0.0
        %320 = vst [vmem:[#allocation2 + $0x60] sm:$0xff] 0.0
        %321 = vst [vmem:[#allocation2 + $0x68] sm:$0xff] 0.0
        %322 = vst [vmem:[#allocation2 + $0x70] sm:$0xff] 0.0
        %323 = vst [vmem:[#allocation2 + $0x78] sm:$0xff] 0.0
      $region44: #{gcn_layer.1} parent=39 // pred_fallthru
        _
      %s324 = smul.u32 %s24, 128
      %s325 = sshra.s32 %s324, 3
      %s326 = sand.u32 %s324, 7
      %s327 = smul.addr %s325, 4
      %s328 = scalar_lea.vmem %s279, %s327
      %v329 = vld [vmem:[%s328] sm:$0xf]
      %v330 = vld [vmem:[%s328 + $0x4] sm:$0xf]
      %v331 = vld [vmem:[%s328 + $0x8] sm:$0xf]
      %v332 = vld [vmem:[%s328 + $0xc] sm:$0xf]
      %v333 = vld [vmem:[%s328 + $0x10] sm:$0xf]
      %v334 = vld [vmem:[%s328 + $0x14] sm:$0xf]
      %v335 = vld [vmem:[%s328 + $0x18] sm:$0xf]
      %v336 = vld [vmem:[%s328 + $0x1c] sm:$0xf]
      %v337 = vld [vmem:[%s328 + $0x20] sm:$0xf]
      %v338 = vld [vmem:[%s328 + $0x24] sm:$0xf]
      %v339 = vld [vmem:[%s328 + $0x28] sm:$0xf]
      %v340 = vld [vmem:[%s328 + $0x2c] sm:$0xf]
      %v341 = vld [vmem:[%s328 + $0x30] sm:$0xf]
      %v342 = vld [vmem:[%s328 + $0x34] sm:$0xf]
      %v343 = vld [vmem:[%s328 + $0x38] sm:$0xf]
      %v344 = vld [vmem:[%s328 + $0x3c] sm:$0xf]
      %v345 = vld [vmem:[%s291] sm:$0xff]
      %v346 = vld [vmem:[%s291 + $0x8] sm:$0xff]
      %v347 = vld [vmem:[%s291 + $0x10] sm:$0xff]
      %v348 = vld [vmem:[%s291 + $0x18] sm:$0xff]
      %v349 = vld [vmem:[%s291 + $0x20] sm:$0xff]
      %v350 = vld [vmem:[%s291 + $0x28] sm:$0xff]
      %v351 = vld [vmem:[%s291 + $0x30] sm:$0xff]
      %v352 = vld [vmem:[%s291 + $0x38] sm:$0xff]
      %v353 = vld [vmem:[%s291 + $0x40] sm:$0xff]
      %v354 = vld [vmem:[%s291 + $0x48] sm:$0xff]
      %v355 = vld [vmem:[%s291 + $0x50] sm:$0xff]
      %v356 = vld [vmem:[%s291 + $0x58] sm:$0xff]
      %v357 = vld [vmem:[%s291 + $0x60] sm:$0xff]
      %v358 = vld [vmem:[%s291 + $0x68] sm:$0xff]
      %v359 = vld [vmem:[%s291 + $0x70] sm:$0xff]
      %v360 = vld [vmem:[%s291 + $0x78] sm:$0xff]
      %v361 = vpack.c.bf16 %v346, %v345
      %v362 = vpack.c.bf16 %v348, %v347
      %v363 = vpack.c.bf16 %v350, %v349
      %v364 = vpack.c.bf16 %v352, %v351
      %v365 = vpack.c.bf16 %v354, %v353
      %v366 = vpack.c.bf16 %v356, %v355
      %v367 = vpack.c.bf16 %v358, %v357
      %v368 = vpack.c.bf16 %v360, %v359
      %v369 = vld [vmem:[#allocation2] sm:$0xff]
      %v370 = vld [vmem:[#allocation2 + $0x8] sm:$0xff]
      %v371 = vld [vmem:[#allocation2 + $0x10] sm:$0xff]
      %v372 = vld [vmem:[#allocation2 + $0x18] sm:$0xff]
      %v373 = vld [vmem:[#allocation2 + $0x20] sm:$0xff]
      %v374 = vld [vmem:[#allocation2 + $0x28] sm:$0xff]
      %v375 = vld [vmem:[#allocation2 + $0x30] sm:$0xff]
      %v376 = vld [vmem:[#allocation2 + $0x38] sm:$0xff]
      %v377 = vld [vmem:[#allocation2 + $0x40] sm:$0xff]
      %v378 = vld [vmem:[#allocation2 + $0x48] sm:$0xff]
      %v379 = vld [vmem:[#allocation2 + $0x50] sm:$0xff]
      %v380 = vld [vmem:[#allocation2 + $0x58] sm:$0xff]
      %v381 = vld [vmem:[#allocation2 + $0x60] sm:$0xff]
      %v382 = vld [vmem:[#allocation2 + $0x68] sm:$0xff]
      %v383 = vld [vmem:[#allocation2 + $0x70] sm:$0xff]
      %v384 = vld [vmem:[#allocation2 + $0x78] sm:$0xff]
      %v401 = vunpack.c.l.b16 %v329
      %v402 = vunpack.c.l.b16 %v330
      %v403 = vunpack.c.l.b16 %v331
      %v404 = vunpack.c.l.b16 %v332
      %v405 = vunpack.c.l.b16 %v333
      %v406 = vunpack.c.l.b16 %v334
      %v407 = vunpack.c.l.b16 %v335
      %v408 = vunpack.c.l.b16 %v336
      %v409 = vunpack.c.l.b16 %v337
      %v410 = vunpack.c.l.b16 %v338
      %v411 = vunpack.c.l.b16 %v339
      %v412 = vunpack.c.l.b16 %v340
      %v413 = vunpack.c.l.b16 %v341
      %v414 = vunpack.c.l.b16 %v342
      %v415 = vunpack.c.l.b16 %v343
      %v416 = vunpack.c.l.b16 %v344
      %v417 = vpack.c.b16 %v402, %v401
      %v418 = vpack.c.b16 %v404, %v403
      %v419 = vpack.c.b16 %v406, %v405
      %v420 = vpack.c.b16 %v408, %v407
      %v421 = vpack.c.b16 %v410, %v409
      %v422 = vpack.c.b16 %v412, %v411
      %v423 = vpack.c.b16 %v414, %v413
      %v424 = vpack.c.b16 %v416, %v415
      %433 = vmatprep.subr.bf16.mxu0 0
      %434 = vmatpush1.bf16.msra.mxu0 %v417
      %435 = vmatprep.subr.bf16.mxu0 0
      %436 = vmatpush1.bf16.msra.mxu0 %v418
      %437 = vmatprep.subr.bf16.mxu0 0
      %438 = vmatpush1.bf16.msra.mxu0 %v419
      %439 = vmatprep.subr.bf16.mxu0 0
      %440 = vmatpush1.bf16.msra.mxu0 %v420
      %441 = vmatprep.subr.bf16.mxu0 0
      %442 = vmatpush1.bf16.msra.mxu0 %v421
      %443 = vmatprep.subr.bf16.mxu0 0
      %444 = vmatpush1.bf16.msra.mxu0 %v422
      %445 = vmatprep.subr.bf16.mxu0 0
      %446 = vmatpush1.bf16.msra.mxu0 %v423
      %447 = vmatprep.subr.bf16.mxu0 0
      %448 = vmatpush1.bf16.msra.mxu0 %v424
      %449 = vmatprep.subr.bf16.mxu0 0
      %450 = vmatpush1.bf16.msra.mxu0 0
      %451 = vmatprep.subr.bf16.mxu0 0
      %452 = vmatpush1.bf16.msra.mxu0 0
      %453 = vmatprep.subr.bf16.mxu0 0
      %454 = vmatpush1.bf16.msra.mxu0 0
      %455 = vmatprep.subr.bf16.mxu0 0
      %456 = vmatpush1.bf16.msra.mxu0 0
      %457 = vmatprep.subr.bf16.mxu0 0
      %458 = vmatpush1.bf16.msra.mxu0 0
      %459 = vmatprep.subr.bf16.mxu0 0
      %460 = vmatpush1.bf16.msra.mxu0 0
      %461 = vmatprep.subr.bf16.mxu0 0
      %462 = vmatpush1.bf16.msra.mxu0 0
      %463 = vmatprep.subr.bf16.mxu0 0
      %464 = vmatpush1.bf16.msra.mxu0 0
      %465 = vmatprep.mubr.bf16.mxu0 0
      %466 = vmatmul.mubr.bf16.gmra.mrb[0].mxu0 %v361
      %v467 = vpop.f32.mrb[0].mxu0
      %v468 = vadd.f32 0.0, %v467
      %v469 = vpop.f32.mrb[0].mxu0
      %v470 = vpop.f32.mrb[0].mxu0
      %v471 = vadd.f32 0.0, %v470
      %v472 = vpop.f32.mrb[0].mxu0
      %473 = vmatprep.mubr.bf16.mxu0 0
      %474 = vmatmul.mubr.bf16.gmra.mrb[0].mxu0 %v362
      %v475 = vpop.f32.mrb[0].mxu0
      %v476 = vadd.f32 0.0, %v475
      %v477 = vpop.f32.mrb[0].mxu0
      %v478 = vpop.f32.mrb[0].mxu0
      %v479 = vadd.f32 0.0, %v478
      %v480 = vpop.f32.mrb[0].mxu0
      %481 = vmatprep.mubr.bf16.mxu0 0
      %482 = vmatmul.mubr.bf16.gmra.mrb[0].mxu0 %v363
      %v483 = vpop.f32.mrb[0].mxu0
      %v484 = vadd.f32 0.0, %v483
      %v485 = vpop.f32.mrb[0].mxu0
      %v486 = vpop.f32.mrb[0].mxu0
      %v487 = vadd.f32 0.0, %v486
      %v488 = vpop.f32.mrb[0].mxu0
      %489 = vmatprep.mubr.bf16.mxu0 0
      %490 = vmatmul.mubr.bf16.gmra.mrb[0].mxu0 %v364
      %v491 = vpop.f32.mrb[0].mxu0
      %v492 = vadd.f32 0.0, %v491
      %v493 = vpop.f32.mrb[0].mxu0
      %v494 = vpop.f32.mrb[0].mxu0
      %v495 = vadd.f32 0.0, %v494
      %v496 = vpop.f32.mrb[0].mxu0
      %497 = vmatprep.mubr.bf16.mxu0 0
      %498 = vmatmul.mubr.bf16.gmra.mrb[0].mxu0 %v365
      %v499 = vpop.f32.mrb[0].mxu0
      %v500 = vadd.f32 0.0, %v499
      %v501 = vpop.f32.mrb[0].mxu0
      %v502 = vpop.f32.mrb[0].mxu0
      %v503 = vadd.f32 0.0, %v502
      %v504 = vpop.f32.mrb[0].mxu0
      %505 = vmatprep.mubr.bf16.mxu0 0
      %506 = vmatmul.mubr.bf16.gmra.mrb[0].mxu0 %v366
      %v507 = vpop.f32.mrb[0].mxu0
      %v508 = vadd.f32 0.0, %v507
      %v509 = vpop.f32.mrb[0].mxu0
      %v510 = vpop.f32.mrb[0].mxu0
      %v511 = vadd.f32 0.0, %v510
      %v512 = vpop.f32.mrb[0].mxu0
      %513 = vmatprep.mubr.bf16.mxu0 0
      %514 = vmatmul.mubr.bf16.gmra.mrb[0].mxu0 %v367
      %v515 = vpop.f32.mrb[0].mxu0
      %v516 = vadd.f32 0.0, %v515
      %v517 = vpop.f32.mrb[0].mxu0
      %v518 = vpop.f32.mrb[0].mxu0
      %v519 = vadd.f32 0.0, %v518
      %v520 = vpop.f32.mrb[0].mxu0
      %521 = vmatprep.mubr.bf16.mxu0 0
      %522 = vmatmul.mubr.bf16.gmra.mrb[0].mxu0 %v368
      %v523 = vpop.f32.mrb[0].mxu0
      %v524 = vadd.f32 0.0, %v523
      %v525 = vpop.f32.mrb[0].mxu0
      %v526 = vpop.f32.mrb[0].mxu0
      %v527 = vadd.f32 0.0, %v526
      %v528 = vpop.f32.mrb[0].mxu0
      %529 = vdwg.mxu0
      %v530 = vadd.f32 %v369, %v468
      %v531 = vadd.f32 %v370, %v471
      %v532 = vadd.f32 %v371, %v476
      %v533 = vadd.f32 %v372, %v479
      %v534 = vadd.f32 %v373, %v484
      %v535 = vadd.f32 %v374, %v487
      %v536 = vadd.f32 %v375, %v492
      %v537 = vadd.f32 %v376, %v495
      %v538 = vadd.f32 %v377, %v500
      %v539 = vadd.f32 %v378, %v503
      %v540 = vadd.f32 %v379, %v508
      %v541 = vadd.f32 %v380, %v511
      %v542 = vadd.f32 %v381, %v516
      %v543 = vadd.f32 %v382, %v519
      %v544 = vadd.f32 %v383, %v524
      %v545 = vadd.f32 %v384, %v527
      %546 = vst [vmem:[#allocation2] sm:$0xff] %v530
      %547 = vst [vmem:[#allocation2 + $0x8] sm:$0xff] %v531
      %548 = vst [vmem:[#allocation2 + $0x10] sm:$0xff] %v532
      %549 = vst [vmem:[#allocation2 + $0x18] sm:$0xff] %v533
      %550 = vst [vmem:[#allocation2 + $0x20] sm:$0xff] %v534
      %551 = vst [vmem:[#allocation2 + $0x28] sm:$0xff] %v535
      %552 = vst [vmem:[#allocation2 + $0x30] sm:$0xff] %v536
      %553 = vst [vmem:[#allocation2 + $0x38] sm:$0xff] %v537
      %554 = vst [vmem:[#allocation2 + $0x40] sm:$0xff] %v538
      %555 = vst [vmem:[#allocation2 + $0x48] sm:$0xff] %v539
      %556 = vst [vmem:[#allocation2 + $0x50] sm:$0xff] %v540
      %557 = vst [vmem:[#allocation2 + $0x58] sm:$0xff] %v541
      %558 = vst [vmem:[#allocation2 + $0x60] sm:$0xff] %v542
      %559 = vst [vmem:[#allocation2 + $0x68] sm:$0xff] %v543
      %560 = vst [vmem:[#allocation2 + $0x70] sm:$0xff] %v544
      %561 = vst [vmem:[#allocation2 + $0x78] sm:$0xff] %v545
      // Predicated region
      $region45: #{gcn_layer.1} parent=39 // pred_check
        %p562 = pneg %p304
      $region46: #{gcn_layer.1} parent=39 // pred_check_branch
        %564 = sbr.rel (%p562) target = $region48
      $region47: #{gcn_layer.1} parent=39 // pred_region
        %v565 = vld [vmem:[#allocation2] sm:$0xff]
        %v566 = vld [vmem:[#allocation2 + $0x8] sm:$0xff]
        %v567 = vld [vmem:[#allocation2 + $0x10] sm:$0xff]
        %v568 = vld [vmem:[#allocation2 + $0x18] sm:$0xff]
        %v569 = vld [vmem:[#allocation2 + $0x20] sm:$0xff]
        %v570 = vld [vmem:[#allocation2 + $0x28] sm:$0xff]
        %v571 = vld [vmem:[#allocation2 + $0x30] sm:$0xff]
        %v572 = vld [vmem:[#allocation2 + $0x38] sm:$0xff]
        %v573 = vld [vmem:[#allocation2 + $0x40] sm:$0xff]
        %v574 = vld [vmem:[#allocation2 + $0x48] sm:$0xff]
        %v575 = vld [vmem:[#allocation2 + $0x50] sm:$0xff]
        %v576 = vld [vmem:[#allocation2 + $0x58] sm:$0xff]
        %v577 = vld [vmem:[#allocation2 + $0x60] sm:$0xff]
        %v578 = vld [vmem:[#allocation2 + $0x68] sm:$0xff]
        %v579 = vld [vmem:[#allocation2 + $0x70] sm:$0xff]
        %v580 = vld [vmem:[#allocation2 + $0x78] sm:$0xff]
        %v581 = vpack.c.bf16 %v566, %v565
        %v582 = vpack.c.bf16 %v568, %v567
        %v583 = vpack.c.bf16 %v570, %v569
        %v584 = vpack.c.bf16 %v572, %v571
        %v585 = vpack.c.bf16 %v574, %v573
        %v586 = vpack.c.bf16 %v576, %v575
        %v587 = vpack.c.bf16 %v578, %v577
        %v588 = vpack.c.bf16 %v580, %v579
        %v589 = vld [vmem:[%s2] sm:$0xf]
        %v590 = vld [vmem:[%s2 + $0x4] sm:$0xf]
        %v591 = vld [vmem:[%s2 + $0x8] sm:$0xf]
        %v592 = vld [vmem:[%s2 + $0xc] sm:$0xf]
        %v593 = vld [vmem:[%s2 + $0x10] sm:$0xf]
        %v594 = vld [vmem:[%s2 + $0x14] sm:$0xf]
        %v595 = vld [vmem:[%s2 + $0x18] sm:$0xf]
        %v596 = vld [vmem:[%s2 + $0x1c] sm:$0xf]
        %v597 = vld [vmem:[%s2 + $0x20] sm:$0xf]
        %v598 = vld [vmem:[%s2 + $0x24] sm:$0xf]
        %v599 = vld [vmem:[%s2 + $0x28] sm:$0xf]
        %v600 = vld [vmem:[%s2 + $0x2c] sm:$0xf]
        %v601 = vld [vmem:[%s2 + $0x30] sm:$0xf]
        %v602 = vld [vmem:[%s2 + $0x34] sm:$0xf]
        %v603 = vld [vmem:[%s2 + $0x38] sm:$0xf]
        %v604 = vld [vmem:[%s2 + $0x3c] sm:$0xf]
        %v605 = vld [vmem:[%s3] sm:$0x1]
        %v607 = vlaneseq
        %v608 = vshrl.u32 %v607, 7
        %v609 = vsub.s32 0, %v608
        %v610 = vrot.slane %v605, %v609
        %v628 = vunpack.c.l.b16 %v589
        %v629 = vunpack.c.l.b16 %v590
        %v630 = vunpack.c.l.b16 %v591
        %v631 = vunpack.c.l.b16 %v592
        %v632 = vunpack.c.l.b16 %v593
        %v633 = vunpack.c.l.b16 %v594
        %v634 = vunpack.c.l.b16 %v595
        %v635 = vunpack.c.l.b16 %v596
        %v636 = vunpack.c.l.b16 %v597
        %v637 = vunpack.c.l.b16 %v598
        %v638 = vunpack.c.l.b16 %v599
        %v639 = vunpack.c.l.b16 %v600
        %v640 = vunpack.c.l.b16 %v601
        %v641 = vunpack.c.l.b16 %v602
        %v642 = vunpack.c.l.b16 %v603
        %v643 = vunpack.c.l.b16 %v604
        %v644 = vpack.c.b16 %v629, %v628
        %v645 = vpack.c.b16 %v631, %v630
        %v646 = vpack.c.b16 %v633, %v632
        %v647 = vpack.c.b16 %v635, %v634
        %v648 = vpack.c.b16 %v637, %v636
        %v649 = vpack.c.b16 %v639, %v638
        %v650 = vpack.c.b16 %v641, %v640
        %v651 = vpack.c.b16 %v643, %v642
        %660 = vmatprep.subr.bf16.mxu0 0
        %661 = vmatpush1.bf16.msra.mxu0 %v644
        %662 = vmatprep.subr.bf16.mxu0 0
        %663 = vmatpush1.bf16.msra.mxu0 %v645
        %664 = vmatprep.subr.bf16.mxu0 0
        %665 = vmatpush1.bf16.msra.mxu0 %v646
        %666 = vmatprep.subr.bf16.mxu0 0
        %667 = vmatpush1.bf16.msra.mxu0 %v647
        %668 = vmatprep.subr.bf16.mxu0 0
        %669 = vmatpush1.bf16.msra.mxu0 %v648
        %670 = vmatprep.subr.bf16.mxu0 0
        %671 = vmatpush1.bf16.msra.mxu0 %v649
        %672 = vmatprep.subr.bf16.mxu0 0
        %673 = vmatpush1.bf16.msra.mxu0 %v650
        %674 = vmatprep.subr.bf16.mxu0 0
        %675 = vmatpush1.bf16.msra.mxu0 %v651
        %676 = vmatprep.subr.bf16.mxu0 0
        %677 = vmatpush1.bf16.msra.mxu0 0
        %678 = vmatprep.subr.bf16.mxu0 0
        %679 = vmatpush1.bf16.msra.mxu0 0
        %680 = vmatprep.subr.bf16.mxu0 0
        %681 = vmatpush1.bf16.msra.mxu0 0
        %682 = vmatprep.subr.bf16.mxu0 0
        %683 = vmatpush1.bf16.msra.mxu0 0
        %684 = vmatprep.subr.bf16.mxu0 0
        %685 = vmatpush1.bf16.msra.mxu0 0
        %686 = vmatprep.subr.bf16.mxu0 0
        %687 = vmatpush1.bf16.msra.mxu0 0
        %688 = vmatprep.subr.bf16.mxu0 0
        %689 = vmatpush1.bf16.msra.mxu0 0
        %690 = vmatprep.subr.bf16.mxu0 0
        %691 = vmatpush1.bf16.msra.mxu0 0
        %692 = vmatprep.mubr.bf16.mxu0 0
        %693 = vmatmul.mubr.bf16.gmra.mrb[0].mxu0 %v581
        %v694 = vpop.f32.mrb[0].mxu0
        %v695 = vadd.f32 %v610, %v694
        %v696 = vpop.f32.mrb[0].mxu0
        %v697 = vpop.f32.mrb[0].mxu0
        %v698 = vadd.f32 %v610, %v697
        %v699 = vpop.f32.mrb[0].mxu0
        %700 = vmatprep.mubr.bf16.mxu0 0
        %701 = vmatmul.mubr.bf16.gmra.mrb[0].mxu0 %v582
        %v702 = vpop.f32.mrb[0].mxu0
        %v703 = vadd.f32 %v610, %v702
        %v704 = vpop.f32.mrb[0].mxu0
        %v705 = vpop.f32.mrb[0].mxu0
        %v706 = vadd.f32 %v610, %v705
        %v707 = vpop.f32.mrb[0].mxu0
        %708 = vmatprep.mubr.bf16.mxu0 0
        %709 = vmatmul.mubr.bf16.gmra.mrb[0].mxu0 %v583
        %v710 = vpop.f32.mrb[0].mxu0
        %v711 = vadd.f32 %v610, %v710
        %v712 = vpop.f32.mrb[0].mxu0
        %v713 = vpop.f32.mrb[0].mxu0
        %v714 = vadd.f32 %v610, %v713
        %v715 = vpop.f32.mrb[0].mxu0
        %716 = vmatprep.mubr.bf16.mxu0 0
        %717 = vmatmul.mubr.bf16.gmra.mrb[0].mxu0 %v584
        %v718 = vpop.f32.mrb[0].mxu0
        %v719 = vadd.f32 %v610, %v718
        %v720 = vpop.f32.mrb[0].mxu0
        %v721 = vpop.f32.mrb[0].mxu0
        %v722 = vadd.f32 %v610, %v721
        %v723 = vpop.f32.mrb[0].mxu0
        %724 = vmatprep.mubr.bf16.mxu0 0
        %725 = vmatmul.mubr.bf16.gmra.mrb[0].mxu0 %v585
        %v726 = vpop.f32.mrb[0].mxu0
        %v727 = vadd.f32 %v610, %v726
        %v728 = vpop.f32.mrb[0].mxu0
        %v729 = vpop.f32.mrb[0].mxu0
        %v730 = vadd.f32 %v610, %v729
        %v731 = vpop.f32.mrb[0].mxu0
        %732 = vmatprep.mubr.bf16.mxu0 0
        %733 = vmatmul.mubr.bf16.gmra.mrb[0].mxu0 %v586
        %v734 = vpop.f32.mrb[0].mxu0
        %v735 = vadd.f32 %v610, %v734
        %v736 = vpop.f32.mrb[0].mxu0
        %v737 = vpop.f32.mrb[0].mxu0
        %v738 = vadd.f32 %v610, %v737
        %v739 = vpop.f32.mrb[0].mxu0
        %740 = vmatprep.mubr.bf16.mxu0 0
        %741 = vmatmul.mubr.bf16.gmra.mrb[0].mxu0 %v587
        %v742 = vpop.f32.mrb[0].mxu0
        %v743 = vadd.f32 %v610, %v742
        %v744 = vpop.f32.mrb[0].mxu0
        %v745 = vpop.f32.mrb[0].mxu0
        %v746 = vadd.f32 %v610, %v745
        %v747 = vpop.f32.mrb[0].mxu0
        %748 = vmatprep.mubr.bf16.mxu0 0
        %749 = vmatmul.mubr.bf16.gmra.mrb[0].mxu0 %v588
        %v750 = vpop.f32.mrb[0].mxu0
        %v751 = vadd.f32 %v610, %v750
        %v752 = vpop.f32.mrb[0].mxu0
        %v753 = vpop.f32.mrb[0].mxu0
        %v754 = vadd.f32 %v610, %v753
        %v755 = vpop.f32.mrb[0].mxu0
        %756 = vdwg.mxu0
        %s757 = sld [smem:[#allocation3]]
        %vm758 = vcmp.ge.f32.partialorder %v695, 0.0
        %vm759 = vcmp.ge.f32.partialorder %v698, 0.0
        %vm760 = vcmp.ge.f32.partialorder %v703, 0.0
        %vm761 = vcmp.ge.f32.partialorder %v706, 0.0
        %vm762 = vcmp.ge.f32.partialorder %v711, 0.0
        %vm763 = vcmp.ge.f32.partialorder %v714, 0.0
        %vm764 = vcmp.ge.f32.partialorder %v719, 0.0
        %vm765 = vcmp.ge.f32.partialorder %v722, 0.0
        %vm766 = vcmp.ge.f32.partialorder %v727, 0.0
        %vm767 = vcmp.ge.f32.partialorder %v730, 0.0
        %vm768 = vcmp.ge.f32.partialorder %v735, 0.0
        %vm769 = vcmp.ge.f32.partialorder %v738, 0.0
        %vm770 = vcmp.ge.f32.partialorder %v743, 0.0
        %vm771 = vcmp.ge.f32.partialorder %v746, 0.0
        %vm772 = vcmp.ge.f32.partialorder %v751, 0.0
        %vm773 = vcmp.ge.f32.partialorder %v754, 0.0
        %v774 = vstv %s757
        %v775 = vmul.f32 %v774, %v695
        %v776 = vmul.f32 %v774, %v698
        %v777 = vmul.f32 %v774, %v703
        %v778 = vmul.f32 %v774, %v706
        %v779 = vmul.f32 %v774, %v711
        %v780 = vmul.f32 %v774, %v714
        %v781 = vmul.f32 %v774, %v719
        %v782 = vmul.f32 %v774, %v722
        %v783 = vmul.f32 %v774, %v727
        %v784 = vmul.f32 %v774, %v730
        %v785 = vmul.f32 %v774, %v735
        %v786 = vmul.f32 %v774, %v738
        %v787 = vmul.f32 %v774, %v743
        %v788 = vmul.f32 %v774, %v746
        %v789 = vmul.f32 %v774, %v751
        %v790 = vmul.f32 %v774, %v754
        %v791 = vsel %vm758, %v695, %v775
        %v792 = vsel %vm759, %v698, %v776
        %v793 = vsel %vm760, %v703, %v777
        %v794 = vsel %vm761, %v706, %v778
        %v795 = vsel %vm762, %v711, %v779
        %v796 = vsel %vm763, %v714, %v780
        %v797 = vsel %vm764, %v719, %v781
        %v798 = vsel %vm765, %v722, %v782
        %v799 = vsel %vm766, %v727, %v783
        %v800 = vsel %vm767, %v730, %v784
        %v801 = vsel %vm768, %v735, %v785
        %v802 = vsel %vm769, %v738, %v786
        %v803 = vsel %vm770, %v743, %v787
        %v804 = vsel %vm771, %v746, %v788
        %v805 = vsel %vm772, %v751, %v789
        %v806 = vsel %vm773, %v754, %v790
        %807 = vst [vmem:[%s301] sm:$0xff] %v791
        %808 = vst [vmem:[%s301 + $0x8] sm:$0xff] %v792
        %809 = vst [vmem:[%s301 + $0x10] sm:$0xff] %v793
        %810 = vst [vmem:[%s301 + $0x18] sm:$0xff] %v794
        %811 = vst [vmem:[%s301 + $0x20] sm:$0xff] %v795
        %812 = vst [vmem:[%s301 + $0x28] sm:$0xff] %v796
        %813 = vst [vmem:[%s301 + $0x30] sm:$0xff] %v797
        %814 = vst [vmem:[%s301 + $0x38] sm:$0xff] %v798
        %815 = vst [vmem:[%s301 + $0x40] sm:$0xff] %v799
        %816 = vst [vmem:[%s301 + $0x48] sm:$0xff] %v800
        %817 = vst [vmem:[%s301 + $0x50] sm:$0xff] %v801
        %818 = vst [vmem:[%s301 + $0x58] sm:$0xff] %v802
        %819 = vst [vmem:[%s301 + $0x60] sm:$0xff] %v803
        %820 = vst [vmem:[%s301 + $0x68] sm:$0xff] %v804
        %821 = vst [vmem:[%s301 + $0x70] sm:$0xff] %v805
        %822 = vst [vmem:[%s301 + $0x78] sm:$0xff] %v806
      $region48: #{gcn_layer.1} parent=39 // pred_fallthru
        _
      %s823 = smul.u32 16, %s23
      %p824 = scmp.lt.s32.totalorder %s22, 1
      %s825 = scalar_select %p824, %s22, 1
      %p826 = scmp.lt.s32.totalorder %s823, 15
      %s827 = scalar_select %p826, %s823, 15
      %s828 = smul.addr %s825, 16
      %s829 = sadd.s32 %s827, %s828
      %s830 = smul.addr %s829, 8
      %s831 = scalar_lea.vmem %s5, %s830
      // Predicated region
      $region49: #{gcn_layer.1} parent=39 // pred_check
        %p832 = pneg %p175
      $region50: #{gcn_layer.1} parent=39 // pred_check_branch
        %834 = sbr.rel (%p832) target = $region52
      $region51: #{gcn_layer.1} parent=39 // pred_region
        %s835 = smul.u32 16, %s23
      $region52: #{gcn_layer.1} parent=39 // pred_fallthru
        _
    $region40: #{gcn_layer.1} parent=5 // pred_fallthru
      _
    %p836 = scmp.le.s32.totalorder 2, %s12
    // Predicated region
    $region53: #{gcn_layer.1} parent=5 // pred_check
      %p837 = pneg %p836
    $region54: #{gcn_layer.1} parent=5 // pred_check_branch
      %839 = sbr.rel (%p837) target = $region56
    $region55: #{gcn_layer.1} parent=5 // pred_region
      %s840 = ssub.s32 %s12, 2
      // Predicated region
      $region57: #{gcn_layer.1} parent=55 // pred_check
        %p841 = pneg %p181
      $region58: #{gcn_layer.1} parent=55 // pred_check_branch
        %843 = sbr.rel (%p841) target = $region60
      $region59: #{gcn_layer.1} parent=55 // pred_region
        %s844 = smul.u32 16, %s26
        %p845 = scmp.lt.s32.totalorder %s25, 1
        %s846 = scalar_select %p845, %s25, 1
        %p847 = scmp.lt.s32.totalorder %s844, 15
        %s848 = scalar_select %p847, %s844, 15
        %s849 = smul.addr %s846, 16
        %s850 = sadd.s32 %s848, %s849
        %s851 = smul.addr %s850, 8
        %s852 = scalar_lea.vmem %s5, %s851
      $region60: #{gcn_layer.1} parent=55 // pred_fallthru
        _
    $region56: #{gcn_layer.1} parent=5 // pred_fallthru
      _
  $region6: #{gcn_layer.1} parent=0 // loop_footer
    %s16 = sadd.s32 1, %s12
  $region7: #{gcn_layer.1} parent=0 // loop_footer_branch
    %11 = sbr.rel target = $region3
  $region8: #{gcn_layer.1} parent=0 // loop_exit
    _

</llo_original>
